<compile_context>
chip_gen: v7x
topology: tpu7x:2x2x1
jax: 0.10.0
libtpu: 0.0.40
codegen_flags: <defaults>
</compile_context>

<pallas_src>
import jax
import jax.numpy as jnp
from jax.experimental import pallas as pl
from jax.experimental.pallas import tpu as pltpu


def _bi_interaction_kernel(x_ref, o_ref):
    # x_ref: (TB, F, E) block of batch rows; o_ref: (TB, E) lane-dense output.
    x = x_ref[...].astype(jnp.float32)               # single upcast, vreg-only cost
    sum_f = jnp.sum(x, axis=1)                        # (TB, E) f32
    square_of_sum = sum_f * sum_f                     # (TB, E) f32
    sum_of_square = jnp.sum(x * x, axis=1)            # (TB, E) f32
    cross = 0.5 * (square_of_sum - sum_of_square)
    o_ref[...] = cross.astype(o_ref.dtype)


def _vmem_budget_bytes():
    """Per-TensorCore VMEM budget (with headroom), generation-aware."""
    cap = 64 << 20  # conservative default: v7x per-TC physical VMEM
    try:
        info = pltpu.get_tpu_info()
        cap = int(getattr(info, "vmem_capacity_bytes", cap))
    except Exception:
        pass
    return (3 * cap) // 4  # ~48 MiB on v7x, ~96 MiB on v5e/v6e


def _choose_batch_tile(B, F, E, in_itemsize, out_itemsize,
                       vmem_budget_bytes, target_block_bytes):
    """Pick TB so the full pipelined VMEM footprint fits the budget and the
    input block is roughly `target_block_bytes`."""
    f_pad = max(8, ((F + 7) // 8) * 8)            # sublane padding of (F, E) slab
    e_pad = max(128, ((E + 127) // 128) * 128)    # lane padding
    slab = f_pad * e_pad                          # padded elems per batch row
    # Per batch-row VMEM footprint:
    #   2x double-buffered input slab
    # + 1 f32 upcast copy of the slab (also covers the x*x temp)
    # + ~4 (TB, E) f32 temporaries
    # + 2x double-buffered output row.
    per_row = (2 * slab * in_itemsize
               + slab * 4
               + 4 * e_pad * 4
               + 2 * e_pad * out_itemsize)
    tb_budget = max(8, vmem_budget_bytes // per_row)
    tb_target = max(8, target_block_bytes // max(1, slab * in_itemsize))
    tb = min(tb_budget, tb_target)
    tb = max(8, (tb // 8) * 8)                    # keep batch tile sublane-aligned
    if B <= tb:
        return B                                  # single block covering whole batch
    return tb


def bi_interaction_pooling(inputs, *, target_block_bytes=8 << 20, block_batch=None):
    """inputs: (B, F, E) -> (B, 1, E), matching torch BiInteractionPooling.forward."""
    B, F, E = inputs.shape
    in_itemsize = jnp.dtype(inputs.dtype).itemsize
    out_itemsize = in_itemsize
    vmem_budget = _vmem_budget_bytes()

    if block_batch is None:
        TB = _choose_batch_tile(B, F, E, in_itemsize, out_itemsize,
                                vmem_budget, target_block_bytes)
    else:
        TB = block_batch  # must be a multiple of 8 or equal to B

    # No batch padding: Pallas masks the partial tail block (OOB input rows are
    # never reflected in written output rows, since rows are independent).
    grid = (pl.cdiv(B, TB),)

    cost = pl.CostEstimate(
        flops=int(B * E * (3 * F + 3)),
        transcendentals=0,
        bytes_accessed=int(B * F * E * in_itemsize + B * E * out_itemsize),
    )

    out2d = pl.pallas_call(
        _bi_interaction_kernel,
        out_shape=jax.ShapeDtypeStruct((B, E), inputs.dtype),
        grid_spec=pltpu.PrefetchScalarGridSpec(
            num_scalar_prefetch=0,
            grid=grid,
            in_specs=[pl.BlockSpec((TB, F, E), lambda b: (b, 0, 0))],
            out_specs=pl.BlockSpec((TB, E), lambda b: (b, 0)),
        ),
        compiler_params=pltpu.CompilerParams(
            # Shards the batch grid across v7x's two TensorCores; no-op on v5e/v6e.
            dimension_semantics=("parallel",),
            vmem_limit_bytes=vmem_budget,
        ),
        cost_estimate=cost,
    )(inputs)

    # TODO(synk): for production shapes with E < 128, a producer-fused (F, B*E)
    # layout (fields on sublanes, batch*embedding lane-dense) would make loads,
    # the reduction and stores fully lane-dense; a standalone HBM transpose pass
    # would cost a full extra read+write, so it is not done here.

    # Restore the (B, 1, E) output shape of the PyTorch module.
    return out2d.reshape(B, 1, E)


def _reference(inputs):
    square_of_sum = jnp.sum(inputs, axis=1, keepdims=True) ** 2
    sum_of_square = jnp.sum(inputs * inputs, axis=1, keepdims=True)
    return 0.5 * (square_of_sum - sum_of_square)


if __name__ == "__main__":
    key = jax.random.PRNGKey(0)

    # Small shape consistent with the module: (batch, field_size, embedding_size).
    B, F, E = 2, 8, 32
    x = jax.random.normal(key, (B, F, E), dtype=jnp.float32)
    out = jax.block_until_ready(bi_interaction_pooling(x))
    ref = _reference(x)
    assert out.shape == (B, 1, E), out.shape
    assert jnp.allclose(out, ref, atol=1e-5, rtol=1e-5), "mismatch vs reference"

    # Ragged-batch check: B % TB != 0 exercises the masked partial tail block
    # that replaced the old jnp.pad path.
    B2 = 20
    x2 = jax.random.normal(jax.random.PRNGKey(1), (B2, F, E), dtype=jnp.float32)
    out2 = jax.block_until_ready(bi_interaction_pooling(x2, block_batch=8))
    ref2 = _reference(x2)
    assert out2.shape == (B2, 1, E), out2.shape
    assert jnp.allclose(out2, ref2, atol=1e-5, rtol=1e-5), "ragged-batch mismatch"

    print("KERNEL_OK")
</pallas_src>

<mosaic_0001>
module attributes {stable_mosaic.version = 11 : i64} {
  func.func @_bi_interaction_kernel(%arg0: i32, %arg1: memref<2x8x32xf32, #tpu.memory_space<vmem>>, %arg2: memref<2x32xf32, #tpu.memory_space<vmem>>) attributes {dimension_semantics = [#tpu.dimension_semantics<parallel>], iteration_bounds = array<i64: 1>, scalar_prefetch = 0 : i64, scratch_operands = 0 : i64, tpu.core_type = #tpu.core_type<tc>, window_params = [{transform_indices = @transform_0, window_bounds = array<i64: 2, 8, 32>}, {transform_indices = @transform_1, window_bounds = array<i64: 2, 32>}]} {
    %c0 = arith.constant 0 : index
    %c0_0 = arith.constant 0 : index
    %c0_1 = arith.constant 0 : index
    %0 = vector.load %arg1[%c0, %c0_0, %c0_1] : memref<2x8x32xf32, #tpu.memory_space<vmem>>, vector<2x8x32xf32>
    %cst = arith.constant dense<0.000000e+00> : vector<2x32xf32>
    %1 = vector.multi_reduction <add>, %0, %cst [1] : vector<2x8x32xf32> to vector<2x32xf32>
    %2 = arith.mulf %1, %1 : vector<2x32xf32>
    %3 = arith.mulf %0, %0 : vector<2x8x32xf32>
    %cst_2 = arith.constant dense<0.000000e+00> : vector<2x32xf32>
    %4 = vector.multi_reduction <add>, %3, %cst_2 [1] : vector<2x8x32xf32> to vector<2x32xf32>
    %5 = arith.subf %2, %4 : vector<2x32xf32>
    %cst_3 = arith.constant 5.000000e-01 : f32
    %6 = vector.broadcast %cst_3 : f32 to vector<2x32xf32>
    %7 = arith.mulf %6, %5 : vector<2x32xf32>
    %c0_4 = arith.constant 0 : index
    %c0_5 = arith.constant 0 : index
    %8 = vector.load %arg2[%c0_4, %c0_5] : memref<2x32xf32, #tpu.memory_space<vmem>>, vector<2x32xf32>
    tpu.vector_store %arg2[%c0_4, %c0_5], %7 {strides = array<i32>} : memref<2x32xf32, #tpu.memory_space<vmem>>, vector<2x32xf32>,
    return
  }
  func.func @transform_0(%arg0: i32) -> (i32, i32, i32) {
    %c0_i32 = arith.constant 0 : i32
    %c0_i32_0 = arith.constant 0 : i32
    %c0_i32_1 = arith.constant 0 : i32
    return %arg0, %c0_i32, %c0_i32_0 : i32, i32, i32
  }
  func.func @transform_1(%arg0: i32) -> (i32, i32) {
    %c0_i32 = arith.constant 0 : i32
    %c0_i32_0 = arith.constant 0 : i32
    return %arg0, %c0_i32 : i32, i32
  }
}

</mosaic_0001>

<llo_original>
// kernel: tpu_custom_call.1
$region0: #{tpu_custom_call.1}
  #allocation0 [shape = 'u32[]', space=smem, size = 0x4, offset = 0x4, fixed_abs, tag = 'smem constant byte address 0x4 - core index']
  #allocation1 [shape = 'u32[144,128]{1,0:T(1,128)}', space=vmem, size = 0x12000, scoped, tag = 'internal scratch']
  %s0 = inlined_call_operand.hbm [shape: f32[2,8,32], index: 0, kind: input, shape index: {}]
  %s1 = inlined_call_operand.hbm [shape: f32[2,32], index: 1, kind: output, shape index: {}]
  %s2 = sld [smem:[#allocation0]]
  $region18: #{tpu_custom_call.1} parent=0
    _
  %s4 = ssub.s32 1, %s2
  %s5 = scalar_select 0, %s4, %s2
  $region1: #{tpu_custom_call.1} parent=0
    #allocation2 [shape = 'u8[8192]{0}', space=vmem, size = 0x2000, scoped, tag = 'input window, operand 0, single buffered']
    #allocation3 [shape = 's32[1]{0}', space=sflag, size = 0x4, scoped, tag = 'scoped memory for tpu_custom_call.1']
    #allocation4 [shape = 's32[1]{0}', space=sflag, size = 0x4, scoped, tag = 'scoped memory for tpu_custom_call.1']
    #allocation5 [shape = 'u8[1024]{0}', space=vmem, size = 0x400, scoped, tag = 'output window, operand 0, single buffered']
    %6 = vsyncpa [#allocation3], 0
    %7 = vsyncpa [#allocation4], 0
    // Predicated region
    $region2: #{tpu_custom_call.1} parent=1 // pred_check
      _
    $region3: #{tpu_custom_call.1} parent=1 // pred_check_branch
      %9 = sbr.rel (0) target = $region5
    $region4: #{tpu_custom_call.1} parent=1 // pred_region
      %s11 = ssub.s32 256, 256
      %12 = vsyncadd [#allocation3], %s11
      %s13 = sshll.u32 [#allocation2], 4
      %s14 = int_to_ptr.vmem [resolvable:$true] %s13
      %19 = dma.hbm_to_vmem [thread:$0]  %s0, 256, %s14, [#allocation3], 128, 128, 8
    $region5: #{tpu_custom_call.1} parent=1 // pred_fallthru
      _
    // Predicated region
    $region6: #{tpu_custom_call.1} parent=1 // pred_check
      _
    $region7: #{tpu_custom_call.1} parent=1 // pred_check_branch
      %21 = sbr.rel (0) target = $region9
    $region8: #{tpu_custom_call.1} parent=1 // pred_region
      %22 = dma.done [#allocation3], 256
    $region9: #{tpu_custom_call.1} parent=1 // pred_fallthru
      _
    %v23 = vld [vmem:[#allocation2] sm:$0xff]
    %v24 = vld [vmem:[#allocation2 + $0x8] sm:$0xff]
    %vm25 = vcmask 261120
    %v26 = vsel %vm25, %v23, 0.0
    %v27 = vrot.slane %v26, 4
    %v28 = vadd.f32 %v26, %v27
    %v29 = vrot.slane %v28, 2
    %v30 = vadd.f32 %v28, %v29
    %v31 = vrot.slane %v30, 1
    %v32 = vadd.f32 %v30, %v31
    %v33 = vsel %vm25, %v24, 0.0
    %v34 = vrot.slane %v33, 4
    %v35 = vadd.f32 %v33, %v34
    %v36 = vrot.slane %v35, 2
    %v37 = vadd.f32 %v35, %v36
    %v38 = vrot.slane %v37, 1
    %v39 = vadd.f32 %v37, %v38
    %v40 = vmul.f32 %v32, %v32
    %v41 = vmul.f32 %v39, %v39
    %v42 = vmul.f32 %v23, %v23
    %v43 = vmul.f32 %v24, %v24
    %v44 = vsel %vm25, %v42, 0.0
    %v45 = vrot.slane %v44, 4
    %v46 = vadd.f32 %v44, %v45
    %v47 = vrot.slane %v46, 2
    %v48 = vadd.f32 %v46, %v47
    %v49 = vrot.slane %v48, 1
    %v50 = vadd.f32 %v48, %v49
    %v51 = vsel %vm25, %v43, 0.0
    %v52 = vrot.slane %v51, 4
    %v53 = vadd.f32 %v51, %v52
    %v54 = vrot.slane %v53, 2
    %v55 = vadd.f32 %v53, %v54
    %v56 = vrot.slane %v55, 1
    %v57 = vadd.f32 %v55, %v56
    %v58 = vsub.f32 %v40, %v50
    %v59 = vsub.f32 %v41, %v57
    %v60 = vmul.f32 %v58, 0.5
    %v61 = vmul.f32 %v59, 0.5
    %vm64 = vcmask 1041409
    %v65 = vsel %vm64, %v61, %v60
    %vm67 = vcmask 254976
    %68 = vst.msk [vmem:[#allocation5] sm:$0x3] %vm67, %v65
    // Predicated region
    $region10: #{tpu_custom_call.1} parent=1 // pred_check
      _
    $region11: #{tpu_custom_call.1} parent=1 // pred_check_branch
      %70 = sbr.rel (0) target = $region13
    $region12: #{tpu_custom_call.1} parent=1 // pred_region
      %s72 = ssub.s32 32, 32
      %73 = vsyncadd [#allocation4], %s72
      %s75 = sshll.u32 [#allocation5], 4
      %s76 = int_to_ptr.vmem [resolvable:$true] %s75
      %78 = dma.vmem_to_hbm [thread:$0]  %s76, 32, %s1, [#allocation4]
    $region13: #{tpu_custom_call.1} parent=1 // pred_fallthru
      _
    // Predicated region
    $region14: #{tpu_custom_call.1} parent=1 // pred_check
      _
    $region15: #{tpu_custom_call.1} parent=1 // pred_check_branch
      %80 = sbr.rel (0) target = $region17
    $region16: #{tpu_custom_call.1} parent=1 // pred_region
      %81 = dma.done [#allocation4], 32
    $region17: #{tpu_custom_call.1} parent=1 // pred_fallthru
      _
    %82 = vsyncpa [#allocation3], 1
    %83 = vsyncpa [#allocation4], 1

</llo_original>
